<compile_context>
chip_gen: v6e
topology: v6e:2x2x1
jax: 0.10.0
libtpu: 0.0.40
codegen_flags: <defaults>
</compile_context>

<pallas_src>
import jax
import jax.numpy as jnp
from jax.experimental import pallas as pl
from jax.experimental.pallas import tpu as pltpu

BETA = 2.0            # Minkowski pooling exponent (deterministic, in-script)
JOD_A = 0.2           # JOD regression slope (deterministic, in-script)
EPS = 1e-4            # Weber contrast stabilizer

LANES = 128           # TPU vreg lane width
SUBLANES = 8          # TPU vreg sublane count (f32)
MAX_TILE_P = 32768    # max pixels per block (multiple of 128)
MIN_DIVISOR_TILE_P = 8192   # smallest exact-divisor tile before we prefer masking
TARGET_TILE_R = 32    # target rows per block (~4-8 MiB streamed per grid step)
SMALL_PROBLEM_ELEMS = 1 << 18   # below this, plain XLA beats kernel launch cost


def _make_kernel(tile_p, ragged, p_valid):
    """Build the per-tile kernel.

    For one (tile_r, tile_p) block, computes per-row / per-lane partial sums
    of squared Weber-contrast differences.  The lane-group reduction is a
    fori_loop over (tile_r, 128) ref slices: contiguous full-vreg loads, pure
    VALU adds into a single live accumulator (no reshape/relayout).
    """
    n_slices = tile_p // LANES

    def kernel(pred_ref, targ_ref, out_ref):
        tile_r = out_ref.shape[0]

        if ragged:
            # Valid pixel columns remaining in this pixel tile.  Only the last
            # tile can overrun H*W; jnp.where (not multiply) zeroes any
            # garbage/NaN read from the partially-DMA'd boundary block.
            limit = p_valid - pl.program_id(0) * tile_p
            lane_ids = jax.lax.broadcasted_iota(jnp.int32, (tile_r, LANES), 1)

        def body(k, acc):
            col = pl.multiple_of(k * LANES, LANES)
            p = pred_ref[:, pl.ds(col, LANES)]
            t = targ_ref[:, pl.ds(col, LANES)]
            # Sum/diff in native dtype (bf16 stays on the bf16 VPU where
            # supported), then promote to f32 for the stabilized divide.
            s = (p + t).astype(jnp.float32)
            d = (p - t).astype(jnp.float32)
            # 0.5 of the Weber mean folded into the stabilizer:
            #   (p - t) / (|p + t| + 2*eps) == contrast / 2   (rescaled x4 later)
            denom = jnp.abs(s) + (2.0 * EPS)
            c = d * pl.reciprocal(denom, approx=True)     # EUP slot
            d2 = c * c                                     # BETA == 2 -> square
            if ragged:
                d2 = jnp.where(lane_ids < (limit - k * LANES), d2, 0.0)
            return acc + d2

        acc = jax.lax.fori_loop(
            0, n_slices, body,
            jnp.zeros((tile_r, LANES), jnp.float32),
            unroll=min(8, n_slices))
        out_ref[...] = acc

    return kernel


def _choose_tile_p(p_eff):
    """Lane-aligned pixel tile; prefer an exact divisor of p_eff (no masking)."""
    p128 = -(-p_eff // LANES) * LANES
    if p128 <= MAX_TILE_P:
        return p128, (p128 != p_eff)          # single pixel tile (maybe ragged)
    if p_eff % LANES == 0:
        for k in range(MAX_TILE_P // LANES, MIN_DIVISOR_TILE_P // LANES - 1, -1):
            t = k * LANES
            if p_eff % t == 0:
                return t, False               # exact tiling, no in-kernel mask
    return MAX_TILE_P, True                   # ragged last tile, masked in-kernel


def _row_contrast_sums_ref(pred2, targ2):
    """Plain-XLA path for tiny problems (same folded-Weber formula)."""
    p = pred2.astype(jnp.float32)
    t = targ2.astype(jnp.float32)
    c = (p - t) / (jnp.abs(p + t) + 2.0 * EPS)
    return jnp.sum(c * c, axis=-1)


def _finalize(row_sums, B, C, H, W):
    """Per-band weights, Minkowski pooling and JOD-style regression."""
    band_w = jnp.linspace(1.0, 0.25, C, dtype=jnp.float32)
    # x4 undoes the 0.5 folded into the Weber stabilizer inside the kernel.
    total = 4.0 * jnp.sum(row_sums.reshape(B, C) * band_w[None, :])
    pooled = (total / jnp.float32(B * C * H * W)) ** (1.0 / BETA)
    return 10.0 - JOD_A * pooled


def fvvdp_loss(predictions, targets, dim_order='BCHW', use_pallas=None):
    """JOD-style perceptual score between predictions and targets (NCHW)."""
    if predictions.ndim == 3:
        predictions = predictions[None]
        targets = targets[None]
    # TODO(synk): only 'BCHW' (or unsqueezed CHW) dim_order is supported here.
    B, C, H, W = predictions.shape
    R, P = B * C, H * W

    # Lane-dense flatten: rows = (batch, channel), lanes = pixels.  Pure
    # metadata reshape (row-major contiguous) — no HBM copy.
    pred2 = predictions.reshape(R, P)
    targ2 = targets.reshape(R, P)

    if use_pallas is None:
        use_pallas = (R * P) >= SMALL_PROBLEM_ELEMS
    if not use_pallas:
        return _finalize(_row_contrast_sums_ref(pred2, targ2), B, C, H, W)

    # Fold pixel groups into extra rows when B*C is small so each grid step
    # still streams a fat block.  Also a pure metadata reshape.
    split, p_eff = 1, P
    while R * split < TARGET_TILE_R and p_eff % (2 * LANES) == 0:
        split *= 2
        p_eff //= 2
    r_eff = R * split
    if split > 1:
        pred2 = pred2.reshape(r_eff, p_eff)
        targ2 = targ2.reshape(r_eff, p_eff)

    itemsize = jnp.dtype(pred2.dtype).itemsize
    # Dtype-aware row tile: bf16 packs 2 rows/sublane -> native (16,128) tile.
    base_r = {4: SUBLANES, 2: 16, 1: 32}.get(itemsize, SUBLANES)
    tile_r = max(base_r, min(TARGET_TILE_R, -(-r_eff // base_r) * base_r))

    tile_p, ragged = _choose_tile_p(p_eff)
    n_pt = -(-p_eff // tile_p)
    n_rt = -(-r_eff // tile_r)

    kernel = _make_kernel(tile_p, ragged, p_eff)

    # Explicit VMEM budget: 2 inputs x 2 pipeline buffers x block (+ tiny output
    # buffers) with 2x headroom; >= 32 MiB lifts v5e's 16 MiB scoped default,
    # <= 56 MiB stays inside v7x's 64 MiB physical VMEM per TensorCore.
    pipeline_bytes = 2 * 2 * tile_r * tile_p * itemsize + 2 * 2 * tile_r * LANES * 4
    vmem_limit = int(min(max(2 * pipeline_bytes, 32 << 20), 56 << 20))

    n_work = r_eff * n_pt * tile_p
    cost = pl.CostEstimate(
        flops=7 * n_work,
        transcendentals=n_work,                               # reciprocal on EUP
        bytes_accessed=2 * R * P * itemsize + r_eff * n_pt * LANES * 4,
    )

    partial = pl.pallas_call(
        kernel,
        out_shape=jax.ShapeDtypeStruct((r_eff, n_pt * LANES), jnp.float32),
        grid_spec=pltpu.PrefetchScalarGridSpec(
            num_scalar_prefetch=0,
            # Pixel-tile axis first: the large axis gets the megacore split on
            # v7x; every step writes an independent output block.
            grid=(n_pt, n_rt),
            in_specs=[
                pl.BlockSpec((tile_r, tile_p), lambda pj, ri: (ri, pj)),
                pl.BlockSpec((tile_r, tile_p), lambda pj, ri: (ri, pj)),
            ],
            out_specs=pl.BlockSpec((tile_r, LANES), lambda pj, ri: (ri, pj)),
        ),
        compiler_params=pltpu.CompilerParams(
            dimension_semantics=("parallel", "parallel"),
            vmem_limit_bytes=vmem_limit,
        ),
        cost_estimate=cost,
    )(pred2, targ2)

    # Finalize on the tiny (r_eff, n_pt*128) partials in plain JAX.
    row_sums = jnp.sum(partial, axis=1).reshape(R, split).sum(axis=1)
    return _finalize(row_sums, B, C, H, W)


if __name__ == "__main__":
    key = jax.random.PRNGKey(0)
    k1, k2 = jax.random.split(key)

    B, C, H, W = 2, 4, 16, 16
    predictions = jax.random.uniform(k1, (B, C, H, W), dtype=jnp.float32)
    targets = jax.random.uniform(k2, (B, C, H, W), dtype=jnp.float32)

    # Pallas path (forced: at demo size the auto-dispatch picks plain XLA).
    result = fvvdp_loss(predictions, targets, use_pallas=True)
    jax.block_until_ready(result)

    # Validate against the plain-XLA reference (approx reciprocal tolerance).
    result_ref = fvvdp_loss(predictions, targets, use_pallas=False)
    jax.block_until_ready(result_ref)
    assert abs(float(result) - float(result_ref)) < 5e-2, (
        float(result), float(result_ref))

    # 3-D (CHW) path, mirroring the unsqueeze in forward().
    result_3d = fvvdp_loss(predictions[0], targets[0], use_pallas=True)
    jax.block_until_ready(result_3d)

    # Native-bf16 path (bf16 over HBM, native (16,128) row tile, f32 compute).
    result_bf16 = fvvdp_loss(predictions.astype(jnp.bfloat16),
                             targets.astype(jnp.bfloat16), use_pallas=True)
    jax.block_until_ready(result_bf16)

    # Auto-dispatch path (small problem -> plain XLA, no kernel launch).
    result_small = fvvdp_loss(predictions, targets)
    jax.block_until_ready(result_small)

    print("KERNEL_OK")
</pallas_src>

<mosaic_0001>
module attributes {stable_mosaic.version = 11 : i64} {
  func.func @kernel(%arg0: i32, %arg1: i32, %arg2: memref<16x128xf32, #tpu.memory_space<vmem>>, %arg3: memref<16x128xf32, #tpu.memory_space<vmem>>, %arg4: memref<16x128xf32, #tpu.memory_space<vmem>>) attributes {dimension_semantics = [#tpu.dimension_semantics<parallel>, #tpu.dimension_semantics<parallel>], iteration_bounds = array<i64: 1, 1>, scalar_prefetch = 0 : i64, scratch_operands = 0 : i64, tpu.core_type = #tpu.core_type<tc>, window_params = [{transform_indices = @transform_0, window_bounds = array<i64: 16, 128>}, {transform_indices = @transform_1, window_bounds = array<i64: 16, 128>}, {transform_indices = @transform_2, window_bounds = array<i64: 16, 128>}]} {
    %cst = arith.constant 0.000000e+00 : f32
    %0 = vector.broadcast %cst : f32 to vector<16x128xf32>
    %c0_i32 = arith.constant 0 : i32
    %c128_i32 = arith.constant 128 : i32
    %1 = arith.muli %c0_i32, %c128_i32 : i32
    %2 = tpu.assume_multiple %1, 128 : i32
    %c0 = arith.constant 0 : index
    %3 = arith.index_cast %2 : i32 to index
    %4 = vector.load %arg2[%c0, %3] : memref<16x128xf32, #tpu.memory_space<vmem>>, vector<16x128xf32>
    %c0_0 = arith.constant 0 : index
    %5 = arith.index_cast %2 : i32 to index
    %6 = vector.load %arg3[%c0_0, %5] : memref<16x128xf32, #tpu.memory_space<vmem>>, vector<16x128xf32>
    %7 = arith.addf %4, %6 : vector<16x128xf32>
    %8 = arith.subf %4, %6 : vector<16x128xf32>
    %9 = math.absf %7 : vector<16x128xf32>
    %cst_1 = arith.constant 2.000000e-04 : f32
    %10 = vector.broadcast %cst_1 : f32 to vector<16x128xf32>
    %11 = arith.addf %9, %10 : vector<16x128xf32>
    %12 = tpu.reciprocal %11 {approx = true} : vector<16x128xf32> -> vector<16x128xf32>
    %13 = arith.mulf %8, %12 : vector<16x128xf32>
    %14 = arith.mulf %13, %13 : vector<16x128xf32>
    %15 = arith.addf %0, %14 : vector<16x128xf32>
    %c1_i32 = arith.constant 1 : i32
    %c0_2 = arith.constant 0 : index
    %c0_3 = arith.constant 0 : index
    %16 = vector.load %arg4[%c0_2, %c0_3] : memref<16x128xf32, #tpu.memory_space<vmem>>, vector<16x128xf32>
    tpu.vector_store %arg4[%c0_2, %c0_3], %15 {strides = array<i32>} : memref<16x128xf32, #tpu.memory_space<vmem>>, vector<16x128xf32>,
    return
  }
  func.func @transform_0(%arg0: i32, %arg1: i32) -> (i32, i32) {
    %c0_i32 = arith.constant 0 : i32
    return %arg1, %arg0 : i32, i32
  }
  func.func @transform_1(%arg0: i32, %arg1: i32) -> (i32, i32) {
    %c0_i32 = arith.constant 0 : i32
    return %arg1, %arg0 : i32, i32
  }
  func.func @transform_2(%arg0: i32, %arg1: i32) -> (i32, i32) {
    %c0_i32 = arith.constant 0 : i32
    return %arg1, %arg0 : i32, i32
  }
}

</mosaic_0001>

<llo_original>
// kernel: tpu_custom_call.1
$region0: #{tpu_custom_call.1}
  #allocation0 [shape = 'u32[]', space=smem, size = 0x4, offset = 0x4, fixed_abs, tag = 'smem constant byte address 0x4 - core index']
  #allocation1 [shape = 'u32[144,128]{1,0:T(1,128)}', space=vmem, size = 0x12000, scoped, tag = 'internal scratch']
  %s0 = inlined_call_operand.hbm [shape: f32[16,128], index: 0, kind: input, shape index: {}]
  %s1 = inlined_call_operand.hbm [shape: f32[16,128], index: 1, kind: input, shape index: {}]
  %s2 = inlined_call_operand.hbm [shape: f32[16,128], index: 2, kind: output, shape index: {}]
  %s3 = sld [smem:[#allocation0]]
  $region26: #{tpu_custom_call.1} parent=0
    _
  %s5 = ssub.s32 1, %s3
  %s6 = scalar_select 0, %s5, %s3
  $region1: #{tpu_custom_call.1} parent=0
    #allocation2 [shape = 'u8[8192]{0}', space=vmem, size = 0x2000, scoped, tag = 'input window, operand 0, single buffered']
    #allocation3 [shape = 's32[1]{0}', space=sflag, size = 0x4, scoped, tag = 'scoped memory for tpu_custom_call.1']
    #allocation4 [shape = 's32[1]{0}', space=sflag, size = 0x4, scoped, tag = 'scoped memory for tpu_custom_call.1']
    #allocation5 [shape = 'u8[8192]{0}', space=vmem, size = 0x2000, scoped, tag = 'input window, operand 1, single buffered']
    #allocation6 [shape = 's32[1]{0}', space=sflag, size = 0x4, scoped, tag = 'scoped memory for tpu_custom_call.1']
    #allocation7 [shape = 'u8[8192]{0}', space=vmem, size = 0x2000, scoped, tag = 'output window, operand 0, single buffered']
    %7 = vsyncpa [#allocation3], 0
    %8 = vsyncpa [#allocation6], 0
    %9 = vsyncpa [#allocation4], 0
    // Predicated region
    $region2: #{tpu_custom_call.1} parent=1 // pred_check
      _
    $region3: #{tpu_custom_call.1} parent=1 // pred_check_branch
      %11 = sbr.rel (0) target = $region5
    $region4: #{tpu_custom_call.1} parent=1 // pred_region
      %s13 = ssub.s32 256, 256
      %14 = vsyncadd [#allocation3], %s13
      %s15 = sshll.u32 [#allocation2], 4
      %s16 = int_to_ptr.vmem [resolvable:$true] %s15
      %21 = dma.hbm_to_vmem [thread:$0]  %s0, 256, %s16, [#allocation3], 128, 128, 8
    $region5: #{tpu_custom_call.1} parent=1 // pred_fallthru
      _
    // Predicated region
    $region6: #{tpu_custom_call.1} parent=1 // pred_check
      _
    $region7: #{tpu_custom_call.1} parent=1 // pred_check_branch
      %23 = sbr.rel (0) target = $region9
    $region8: #{tpu_custom_call.1} parent=1 // pred_region
      %s25 = ssub.s32 256, 256
      %26 = vsyncadd [#allocation6], %s25
      %s27 = sshll.u32 [#allocation5], 4
      %s28 = int_to_ptr.vmem [resolvable:$true] %s27
      %33 = dma.hbm_to_vmem [thread:$0]  %s1, 256, %s28, [#allocation6], 128, 128, 8
    $region9: #{tpu_custom_call.1} parent=1 // pred_fallthru
      _
    // Predicated region
    $region10: #{tpu_custom_call.1} parent=1 // pred_check
      _
    $region11: #{tpu_custom_call.1} parent=1 // pred_check_branch
      %35 = sbr.rel (0) target = $region13
    $region12: #{tpu_custom_call.1} parent=1 // pred_region
      %36 = dma.done [#allocation3], 256
    $region13: #{tpu_custom_call.1} parent=1 // pred_fallthru
      _
    // Predicated region
    $region14: #{tpu_custom_call.1} parent=1 // pred_check
      _
    $region15: #{tpu_custom_call.1} parent=1 // pred_check_branch
      %38 = sbr.rel (0) target = $region17
    $region16: #{tpu_custom_call.1} parent=1 // pred_region
      %39 = dma.done [#allocation6], 256
    $region17: #{tpu_custom_call.1} parent=1 // pred_fallthru
      _
    %v40 = vld [vmem:[#allocation2] sm:$0xff]
    %v41 = vld [vmem:[#allocation2 + $0x8] sm:$0xff]
    %v42 = vld [vmem:[#allocation5] sm:$0xff]
    %v43 = vld [vmem:[#allocation5 + $0x8] sm:$0xff]
    %v44 = vadd.f32 %v40, %v42
    %v45 = vadd.f32 %v41, %v43
    %v46 = vsub.f32 %v40, %v42
    %v47 = vsub.f32 %v41, %v43
    %v48 = vand.u32 2147483647, %v44
    %v49 = vand.u32 2147483647, %v45
    %v50 = vadd.f32 %v48, 0.0002
    %v51 = vadd.f32 %v49, 0.0002
    %v52 = vrcp.pop %v50
    %v53 = vrcp.pop %v51
    %v54 = vmul.f32 %v46, %v52
    %v55 = vmul.f32 %v47, %v53
    %v56 = vmul.f32 %v54, %v54
    %v57 = vmul.f32 %v55, %v55
    %v58 = vadd.f32 %v56, 0.0
    %v59 = vadd.f32 %v57, 0.0
    %60 = vst [vmem:[#allocation7] sm:$0xff] %v58
    %61 = vst [vmem:[#allocation7 + $0x8] sm:$0xff] %v59
    // Predicated region
    $region18: #{tpu_custom_call.1} parent=1 // pred_check
      _
    $region19: #{tpu_custom_call.1} parent=1 // pred_check_branch
      %63 = sbr.rel (0) target = $region21
    $region20: #{tpu_custom_call.1} parent=1 // pred_region
      %s65 = ssub.s32 256, 256
      %66 = vsyncadd [#allocation4], %s65
      %s67 = sshll.u32 [#allocation7], 4
      %s68 = int_to_ptr.vmem [resolvable:$true] %s67
      %73 = dma.vmem_to_hbm [thread:$0]  %s68, 256, %s2, [#allocation4], 128, 128, 8
    $region21: #{tpu_custom_call.1} parent=1 // pred_fallthru
      _
    // Predicated region
    $region22: #{tpu_custom_call.1} parent=1 // pred_check
      _
    $region23: #{tpu_custom_call.1} parent=1 // pred_check_branch
      %75 = sbr.rel (0) target = $region25
    $region24: #{tpu_custom_call.1} parent=1 // pred_region
      %76 = dma.done [#allocation4], 256
    $region25: #{tpu_custom_call.1} parent=1 // pred_fallthru
      _
    %77 = vsyncpa [#allocation3], 1
    %78 = vsyncpa [#allocation6], 1
    %79 = vsyncpa [#allocation4], 1

</llo_original>
